<compile_context>
chip_gen: v5e
topology: v5e:2x2
jax: 0.10.0
libtpu: 0.0.40
codegen_flags: <defaults>
</compile_context>

<pallas_src>
import jax
import jax.numpy as jnp
from jax import lax
from jax.experimental import pallas as pl
from jax.experimental.pallas import tpu as pltpu


def _round_up(a, b):
    return (a + b - 1) // b * b


def _const_spec(shape):
    """BlockSpec for a grid-invariant operand; single-buffer when supported."""
    index_map = lambda i: (0,) * len(shape)
    if hasattr(pl, "Buffered"):
        try:
            return pl.BlockSpec(shape, index_map, pipeline_mode=pl.Buffered(1))
        except TypeError:
            pass
    return pl.BlockSpec(shape, index_map)


def _self_output_kernel(x_ref, w_ref, p_ref, res_ref, o_ref, *, eps, inv_n):
    # x_ref:   (tm, K)  bf16   activations tile
    # w_ref:   (N, K)   bf16   dense weight in torch layout (out, in)
    # p_ref:   (3, N)   f32    rows: bias, gamma, beta
    # res_ref: (tm, N)  bf16   residual (input_tensor) tile
    # o_ref:   (tm, N)         output tile
    acc = lax.dot_general(
        x_ref[...], w_ref[...],
        dimension_numbers=(((1,), (1,)), ((), ())),   # x @ W.T on the MXU
        preferred_element_type=jnp.float32)           # (tm, N) f32 accumulator

    p = p_ref[...]
    bias = p[0:1, :]
    gamma = p[1:2, :]
    beta = p[2:3, :]

    h = acc + bias + res_ref[...].astype(jnp.float32)

    # One-pass LayerNorm statistics over the hidden axis (fully resident).
    s1 = jnp.sum(h, axis=-1, keepdims=True)
    s2 = jnp.sum(h * h, axis=-1, keepdims=True)
    mean = s1 * inv_n
    var = s2 * inv_n - mean * mean
    inv_std = lax.rsqrt(var + eps)

    out = (h - mean) * inv_std * gamma + beta
    o_ref[...] = out.astype(o_ref.dtype)


def roberta_self_output(hidden_states, input_tensor, weight, bias, gamma, beta,
                        *, eps=1e-5):
    """Fused Pallas forward of RobertaSelfOutput (eval mode).

    hidden_states, input_tensor: (B, S, H)
    weight: (H, H) torch nn.Linear layout (out_features, in_features)
    bias, gamma, beta: (H,)
    """
    B, S, H = hidden_states.shape
    K = H
    N = H
    M = B * S
    out_dtype = hidden_states.dtype

    # ---- glue: flatten, cast matmul inputs to bf16, pack the tiny vectors ---
    x2 = hidden_states.reshape(M, K).astype(jnp.bfloat16)
    res2 = input_tensor.reshape(M, N).astype(jnp.bfloat16)
    w2 = weight.astype(jnp.bfloat16)                       # (N, K), no transpose
    params = jnp.stack([bias, gamma, beta]).astype(jnp.float32)   # (3, N)

    # ---- tile selection: big, MXU-aligned M tiles; >=2 steps when possible --
    if M >= 1024:
        tm = 512
    elif M >= 256:
        tm = 256                 # keeps >=2 grid steps for M in [512, 1023] (v7x)
    else:
        tm = _round_up(M, 8)
    grid = (pl.cdiv(M, tm),)     # ragged last block handled by Pallas, no pad

    # ---- VMEM budget / cost hints -------------------------------------------
    bf16_b, f32_b = 2, 4
    out_b = jnp.dtype(out_dtype).itemsize
    vmem_est = (2 * tm * K * bf16_b          # x tile (double-buffered)
                + 2 * tm * N * bf16_b        # residual tile
                + 2 * tm * N * out_b         # output tile
                + 2 * K * N * bf16_b         # weight (conservative: 2 bufs)
                + 3 * N * f32_b              # packed bias/gamma/beta
                + 4 * tm * N * f32_b)        # f32 epilogue temporaries
    vmem_limit = int(min(max(vmem_est + (8 << 20), 24 << 20), 40 << 20))

    cost = pl.CostEstimate(
        flops=2 * M * K * N + 10 * M * N,
        transcendentals=M,                                   # rsqrt per row
        bytes_accessed=(bf16_b * (M * K + K * N + M * N)
                        + f32_b * 3 * N + out_b * M * N),
    )

    kernel = lambda *refs: _self_output_kernel(*refs, eps=eps, inv_n=1.0 / N)

    out2 = pl.pallas_call(
        kernel,
        out_shape=jax.ShapeDtypeStruct((M, N), out_dtype),
        grid_spec=pltpu.PrefetchScalarGridSpec(
            num_scalar_prefetch=0,
            grid=grid,
            in_specs=[
                pl.BlockSpec((tm, K), lambda i: (i, 0)),     # x tile
                _const_spec((N, K)),                         # weight (resident)
                _const_spec((3, N)),                         # bias/gamma/beta
                pl.BlockSpec((tm, N), lambda i: (i, 0)),     # residual tile
            ],
            out_specs=pl.BlockSpec((tm, N), lambda i: (i, 0)),
        ),
        compiler_params=pltpu.CompilerParams(
            dimension_semantics=("parallel",),
            vmem_limit_bytes=vmem_limit,
        ),
        cost_estimate=cost,
    )(x2, w2, params, res2)

    return out2.reshape(B, S, N)


def _reference(hidden_states, input_tensor, weight, bias, gamma, beta, eps):
    # Matches the kernel's data path: bf16-quantized matmul inputs, f32 math.
    x = hidden_states.astype(jnp.bfloat16).astype(jnp.float32)
    r = input_tensor.astype(jnp.bfloat16).astype(jnp.float32)
    w = weight.astype(jnp.bfloat16).astype(jnp.float32)
    h = jnp.einsum("bsk,nk->bsn", x, w) + bias
    h = h + r
    mean = h.mean(-1, keepdims=True)
    var = ((h - mean) ** 2).mean(-1, keepdims=True)
    return (h - mean) / jnp.sqrt(var + eps) * gamma + beta


if __name__ == "__main__":
    # Small shapes consistent with the module: batch=2, seq=8, hidden=128.
    B, S, H = 2, 8, 128
    eps = 1e-5

    key = jax.random.PRNGKey(0)
    kx, kr, kw, kb, kg = jax.random.split(key, 5)

    hidden_states = jax.random.normal(kx, (B, S, H), dtype=jnp.float32)
    input_tensor = jax.random.normal(kr, (B, S, H), dtype=jnp.float32)
    # torch nn.Linear layout: weight (out_features, in_features), bias (out,)
    weight = jax.random.normal(kw, (H, H), dtype=jnp.float32) * 0.05
    bias = jax.random.normal(kb, (H,), dtype=jnp.float32) * 0.05
    gamma = 1.0 + 0.1 * jax.random.normal(kg, (H,), dtype=jnp.float32)
    beta = jnp.zeros((H,), dtype=jnp.float32)

    out = roberta_self_output(hidden_states, input_tensor, weight, bias,
                              gamma, beta, eps=eps)
    out = jax.block_until_ready(out)

    ref = _reference(hidden_states, input_tensor, weight, bias, gamma, beta, eps)
    assert out.shape == (B, S, H), out.shape
    assert jnp.allclose(out, ref, atol=2e-3, rtol=2e-3), "mismatch vs reference"

    print("KERNEL_OK")
</pallas_src>

<mosaic_0001>
module attributes {stable_mosaic.version = 11 : i64} {
  func.func @_lambda_(%arg0: i32, %arg1: memref<16x128xbf16, #tpu.memory_space<vmem>>, %arg2: memref<128x128xbf16, #tpu.memory_space<vmem>>, %arg3: memref<3x128xf32, #tpu.memory_space<vmem>>, %arg4: memref<16x128xbf16, #tpu.memory_space<vmem>>, %arg5: memref<16x128xf32, #tpu.memory_space<vmem>>) attributes {dimension_semantics = [#tpu.dimension_semantics<parallel>], iteration_bounds = array<i64: 1>, scalar_prefetch = 0 : i64, scratch_operands = 0 : i64, tpu.core_type = #tpu.core_type<tc>, window_params = [{transform_indices = @transform_0, window_bounds = array<i64: 16, 128>}, {pipeline_mode = #tpu.pipeline_mode<synchronous>, transform_indices = @transform_1, window_bounds = array<i64: 128, 128>}, {pipeline_mode = #tpu.pipeline_mode<synchronous>, transform_indices = @transform_2, window_bounds = array<i64: 3, 128>}, {transform_indices = @transform_3, window_bounds = array<i64: 16, 128>}, {transform_indices = @transform_4, window_bounds = array<i64: 16, 128>}]} {
    %c0 = arith.constant 0 : index
    %c0_0 = arith.constant 0 : index
    %0 = vector.load %arg1[%c0, %c0_0] : memref<16x128xbf16, #tpu.memory_space<vmem>>, vector<16x128xbf16>
    %c0_1 = arith.constant 0 : index
    %c0_2 = arith.constant 0 : index
    %1 = vector.load %arg2[%c0_1, %c0_2] : memref<128x128xbf16, #tpu.memory_space<vmem>>, vector<128x128xbf16>
    %cst = arith.constant dense<0.000000e+00> : vector<16x128xf32>
    %2 = tpu.matmul %0, %1, %cst {dimension_numbers = #tpu.dot_dimension_numbers<[1], [1], [0], [0], [0, 0, 1, 0], [], []>} : vector<16x128xbf16>, vector<128x128xbf16>, vector<16x128xf32> -> vector<16x128xf32>
    %c0_3 = arith.constant 0 : index
    %c0_4 = arith.constant 0 : index
    %3 = vector.load %arg3[%c0_3, %c0_4] : memref<3x128xf32, #tpu.memory_space<vmem>>, vector<3x128xf32>
    %4 = vector.extract_strided_slice %3 {offsets = [0, 0], sizes = [1, 128], strides = [1, 1]} : vector<3x128xf32> to vector<1x128xf32>
    %5 = vector.extract_strided_slice %3 {offsets = [1, 0], sizes = [1, 128], strides = [1, 1]} : vector<3x128xf32> to vector<1x128xf32>
    %6 = vector.extract_strided_slice %3 {offsets = [2, 0], sizes = [1, 128], strides = [1, 1]} : vector<3x128xf32> to vector<1x128xf32>
    %7 = vector.broadcast %4 : vector<1x128xf32> to vector<16x128xf32>
    %8 = arith.addf %2, %7 : vector<16x128xf32>
    %c0_5 = arith.constant 0 : index
    %c0_6 = arith.constant 0 : index
    %9 = vector.load %arg4[%c0_5, %c0_6] : memref<16x128xbf16, #tpu.memory_space<vmem>>, vector<16x128xbf16>
    %10 = arith.extf %9 : vector<16x128xbf16> to vector<16x128xf32>
    %11 = arith.addf %8, %10 : vector<16x128xf32>
    %cst_7 = arith.constant dense<0.000000e+00> : vector<16xf32>
    %12 = vector.multi_reduction <add>, %11, %cst_7 [1] : vector<16x128xf32> to vector<16xf32>
    %13 = vector.shape_cast %12 : vector<16xf32> to vector<16x1xf32>
    %14 = arith.mulf %11, %11 : vector<16x128xf32>
    %cst_8 = arith.constant dense<0.000000e+00> : vector<16xf32>
    %15 = vector.multi_reduction <add>, %14, %cst_8 [1] : vector<16x128xf32> to vector<16xf32>
    %16 = vector.shape_cast %15 : vector<16xf32> to vector<16x1xf32>
    %cst_9 = arith.constant 7.812500e-03 : f32
    %17 = vector.broadcast %cst_9 : f32 to vector<16x1xf32>
    %18 = arith.mulf %13, %17 : vector<16x1xf32>
    %cst_10 = arith.constant 7.812500e-03 : f32
    %19 = vector.broadcast %cst_10 : f32 to vector<16x1xf32>
    %20 = arith.mulf %16, %19 : vector<16x1xf32>
    %21 = arith.mulf %18, %18 : vector<16x1xf32>
    %22 = arith.subf %20, %21 : vector<16x1xf32>
    %cst_11 = arith.constant 9.99999974E-6 : f32
    %23 = vector.broadcast %cst_11 : f32 to vector<16x1xf32>
    %24 = arith.addf %22, %23 : vector<16x1xf32>
    %25 = math.rsqrt %24 : vector<16x1xf32>
    %26 = vector.broadcast %18 : vector<16x1xf32> to vector<16x128xf32>
    %27 = arith.subf %11, %26 : vector<16x128xf32>
    %28 = vector.broadcast %25 : vector<16x1xf32> to vector<16x128xf32>
    %29 = arith.mulf %27, %28 : vector<16x128xf32>
    %30 = vector.broadcast %5 : vector<1x128xf32> to vector<16x128xf32>
    %31 = arith.mulf %29, %30 : vector<16x128xf32>
    %32 = vector.broadcast %6 : vector<1x128xf32> to vector<16x128xf32>
    %33 = arith.addf %31, %32 : vector<16x128xf32>
    %c0_12 = arith.constant 0 : index
    %c0_13 = arith.constant 0 : index
    %34 = vector.load %arg5[%c0_12, %c0_13] : memref<16x128xf32, #tpu.memory_space<vmem>>, vector<16x128xf32>
    tpu.vector_store %arg5[%c0_12, %c0_13], %33 {strides = array<i32>} : memref<16x128xf32, #tpu.memory_space<vmem>>, vector<16x128xf32>,
    return
  }
  func.func @transform_0(%arg0: i32) -> (i32, i32) {
    %c0_i32 = arith.constant 0 : i32
    %c0_i32_0 = arith.constant 0 : i32
    return %arg0, %c0_i32 : i32, i32
  }
  func.func @transform_1(%arg0: i32) -> (i32, i32) {
    %c0_i32 = arith.constant 0 : i32
    %c0_i32_0 = arith.constant 0 : i32
    %c0_i32_1 = arith.constant 0 : i32
    return %c0_i32, %c0_i32_0 : i32, i32
  }
  func.func @transform_2(%arg0: i32) -> (i32, i32) {
    %c0_i32 = arith.constant 0 : i32
    %c0_i32_0 = arith.constant 0 : i32
    %c0_i32_1 = arith.constant 0 : i32
    return %c0_i32, %c0_i32_0 : i32, i32
  }
  func.func @transform_3(%arg0: i32) -> (i32, i32) {
    %c0_i32 = arith.constant 0 : i32
    %c0_i32_0 = arith.constant 0 : i32
    return %arg0, %c0_i32 : i32, i32
  }
  func.func @transform_4(%arg0: i32) -> (i32, i32) {
    %c0_i32 = arith.constant 0 : i32
    %c0_i32_0 = arith.constant 0 : i32
    return %arg0, %c0_i32 : i32, i32
  }
}

</mosaic_0001>

<llo_original>
// kernel: tpu_custom_call.1
$region0: #{tpu_custom_call.1}
  #allocation0 [shape = 'u32[]', space=smem, size = 0x4, offset = 0x4, fixed_abs, tag = 'smem constant byte address 0x4 - core index']
  #allocation1 [shape = 'u32[72,128]{1,0:T(1,128)}', space=vmem, size = 0x9000, scoped, tag = 'internal scratch']
  %s0 = inlined_call_operand.hbm [shape: bf16[16,128], index: 0, kind: input, shape index: {}]
  %s1 = inlined_call_operand.hbm [shape: bf16[128,128], index: 1, kind: input, shape index: {}]
  %s2 = inlined_call_operand.hbm [shape: f32[3,128], index: 2, kind: input, shape index: {}]
  %s3 = inlined_call_operand.hbm [shape: bf16[16,128], index: 3, kind: input, shape index: {}]
  %s4 = inlined_call_operand.hbm [shape: f32[16,128], index: 4, kind: output, shape index: {}]
  %s5 = sld [smem:[#allocation0]]
  $region42: #{tpu_custom_call.1} parent=0
    _
  %s7 = ssub.s32 1, %s5
  %s8 = scalar_select 0, %s7, %s5
  $region1: #{tpu_custom_call.1} parent=0
    #allocation2 [shape = 'u8[4096]{0}', space=vmem, size = 0x1000, scoped, tag = 'input window, operand 0, single buffered']
    #allocation3 [shape = 's32[1]{0}', space=sflag, size = 0x4, scoped, tag = 'scoped memory for tpu_custom_call.1']
    #allocation4 [shape = 's32[1]{0}', space=sflag, size = 0x4, scoped, tag = 'scoped memory for tpu_custom_call.1']
    #allocation5 [shape = 'u8[32768]{0}', space=vmem, size = 0x8000, scoped, tag = 'input window, operand 1, single buffered']
    #allocation6 [shape = 's32[1]{0}', space=sflag, size = 0x4, scoped, tag = 'scoped memory for tpu_custom_call.1']
    #allocation7 [shape = 'u8[2048]{0}', space=vmem, size = 0x800, scoped, tag = 'input window, operand 2, single buffered']
    #allocation8 [shape = 'u8[4096]{0}', space=vmem, size = 0x1000, scoped, tag = 'input window, operand 3, single buffered']
    #allocation9 [shape = 's32[1]{0}', space=sflag, size = 0x4, scoped, tag = 'scoped memory for tpu_custom_call.1']
    #allocation10 [shape = 'u8[8192]{0}', space=vmem, size = 0x2000, scoped, tag = 'output window, operand 0, single buffered']
    %9 = vsyncpa [#allocation3], 0
    %10 = vsyncpa [#allocation6], 0
    %11 = vsyncpa [#allocation9], 0
    %12 = vsyncpa [#allocation4], 0
    // Predicated region
    $region2: #{tpu_custom_call.1} parent=1 // pred_check
      _
    $region3: #{tpu_custom_call.1} parent=1 // pred_check_branch
      %14 = sbr.rel (0) target = $region5
    $region4: #{tpu_custom_call.1} parent=1 // pred_region
      %16 = vsyncadd [#allocation3], 0
      %s17 = sshll.u32 %s0, 4
      %s18 = int_to_ptr.hbm [resolvable:$true] %s17
      %s19 = sshll.u32 [#allocation2], 4
      %s20 = int_to_ptr.vmem [resolvable:$true] %s19
      %25 = dma.hbm_to_vmem [thread:$0]  %s18, 128, %s20, [#allocation3], 64, 64, 4
    $region5: #{tpu_custom_call.1} parent=1 // pred_fallthru
      _
    // Predicated region
    $region6: #{tpu_custom_call.1} parent=1 // pred_check
      _
    $region7: #{tpu_custom_call.1} parent=1 // pred_check_branch
      %27 = sbr.rel (0) target = $region9
    $region8: #{tpu_custom_call.1} parent=1 // pred_region
      %29 = vsyncadd [#allocation6], 0
      %s30 = sshll.u32 %s1, 4
      %s31 = int_to_ptr.hbm [resolvable:$true] %s30
      %s32 = sshll.u32 [#allocation5], 4
      %s33 = int_to_ptr.vmem [resolvable:$true] %s32
      %38 = dma.hbm_to_vmem [thread:$0]  %s31, 1024, %s33, [#allocation6], 64, 64, 4
    $region9: #{tpu_custom_call.1} parent=1 // pred_fallthru
      _
    // Predicated region
    $region10: #{tpu_custom_call.1} parent=1 // pred_check
      _
    $region11: #{tpu_custom_call.1} parent=1 // pred_check_branch
      %40 = sbr.rel (0) target = $region13
    $region12: #{tpu_custom_call.1} parent=1 // pred_region
      %42 = vsyncadd [#allocation6], 0
      %s44 = sshll.u32 %s2, 4
      %s45 = int_to_ptr.hbm [resolvable:$true] %s44
      %s46 = sshll.u32 [#allocation7], 4
      %s47 = int_to_ptr.vmem [resolvable:$true] %s46
      %49 = dma.hbm_to_vmem [thread:$0]  %s45, 64, %s47, [#allocation6]
    $region13: #{tpu_custom_call.1} parent=1 // pred_fallthru
      _
    // Predicated region
    $region14: #{tpu_custom_call.1} parent=1 // pred_check
      _
    $region15: #{tpu_custom_call.1} parent=1 // pred_check_branch
      %51 = sbr.rel (0) target = $region17
    $region16: #{tpu_custom_call.1} parent=1 // pred_region
      %53 = vsyncadd [#allocation9], 0
      %s54 = sshll.u32 %s3, 4
      %s55 = int_to_ptr.hbm [resolvable:$true] %s54
      %s56 = sshll.u32 [#allocation8], 4
      %s57 = int_to_ptr.vmem [resolvable:$true] %s56
      %62 = dma.hbm_to_vmem [thread:$0]  %s55, 128, %s57, [#allocation9], 64, 64, 4
    $region17: #{tpu_custom_call.1} parent=1 // pred_fallthru
      _
    // Predicated region
    $region18: #{tpu_custom_call.1} parent=1 // pred_check
      _
    $region19: #{tpu_custom_call.1} parent=1 // pred_check_branch
      %64 = sbr.rel (0) target = $region21
    $region20: #{tpu_custom_call.1} parent=1 // pred_region
      %66 = dma.done [#allocation3], 128
    $region21: #{tpu_custom_call.1} parent=1 // pred_fallthru
      _
    // Predicated region
    $region22: #{tpu_custom_call.1} parent=1 // pred_check
      _
    $region23: #{tpu_custom_call.1} parent=1 // pred_check_branch
      %68 = sbr.rel (0) target = $region25
    $region24: #{tpu_custom_call.1} parent=1 // pred_region
      %70 = dma.done [#allocation6], 1024
    $region25: #{tpu_custom_call.1} parent=1 // pred_fallthru
      _
    // Predicated region
    $region26: #{tpu_custom_call.1} parent=1 // pred_check
      _
    $region27: #{tpu_custom_call.1} parent=1 // pred_check_branch
      %72 = sbr.rel (0) target = $region29
    $region28: #{tpu_custom_call.1} parent=1 // pred_region
      %74 = dma.done [#allocation6], 64
    $region29: #{tpu_custom_call.1} parent=1 // pred_fallthru
      _
    // Predicated region
    $region30: #{tpu_custom_call.1} parent=1 // pred_check
      _
    $region31: #{tpu_custom_call.1} parent=1 // pred_check_branch
      %76 = sbr.rel (0) target = $region33
    $region32: #{tpu_custom_call.1} parent=1 // pred_region
      %78 = dma.done [#allocation9], 128
    $region33: #{tpu_custom_call.1} parent=1 // pred_fallthru
      _
    %v79 = vld [vmem:[#allocation2] sm:$0xf]
    %v80 = vld [vmem:[#allocation2 + $0x4] sm:$0xf]
    %v81 = vld [vmem:[#allocation5] sm:$0xf]
    %v82 = vld [vmem:[#allocation5 + $0x4] sm:$0xf]
    %v83 = vld [vmem:[#allocation5 + $0x8] sm:$0xf]
    %v84 = vld [vmem:[#allocation5 + $0xc] sm:$0xf]
    %v85 = vld [vmem:[#allocation5 + $0x10] sm:$0xf]
    %v86 = vld [vmem:[#allocation5 + $0x14] sm:$0xf]
    %v87 = vld [vmem:[#allocation5 + $0x18] sm:$0xf]
    %v88 = vld [vmem:[#allocation5 + $0x1c] sm:$0xf]
    %v89 = vld [vmem:[#allocation5 + $0x20] sm:$0xf]
    %v90 = vld [vmem:[#allocation5 + $0x24] sm:$0xf]
    %v91 = vld [vmem:[#allocation5 + $0x28] sm:$0xf]
    %v92 = vld [vmem:[#allocation5 + $0x2c] sm:$0xf]
    %v93 = vld [vmem:[#allocation5 + $0x30] sm:$0xf]
    %v94 = vld [vmem:[#allocation5 + $0x34] sm:$0xf]
    %v95 = vld [vmem:[#allocation5 + $0x38] sm:$0xf]
    %v96 = vld [vmem:[#allocation5 + $0x3c] sm:$0xf]
    %v97 = vld [vmem:[#allocation7] sm:$0x7]
    %v98 = vperm.slane %v97, 0
    %v101 = vunpack.c.l.b16 %v79
    %v102 = vunpack.c.l.b16 %v80
    %v103 = vpack.c.b16 %v102, %v101
    %v121 = vunpack.c.l.b16 %v81
    %v122 = vunpack.c.l.b16 %v82
    %v123 = vunpack.c.l.b16 %v83
    %v124 = vunpack.c.l.b16 %v84
    %v125 = vunpack.c.l.b16 %v85
    %v126 = vunpack.c.l.b16 %v86
    %v127 = vunpack.c.l.b16 %v87
    %v128 = vunpack.c.l.b16 %v88
    %v129 = vunpack.c.l.b16 %v89
    %v130 = vunpack.c.l.b16 %v90
    %v131 = vunpack.c.l.b16 %v91
    %v132 = vunpack.c.l.b16 %v92
    %v133 = vunpack.c.l.b16 %v93
    %v134 = vunpack.c.l.b16 %v94
    %v135 = vunpack.c.l.b16 %v95
    %v136 = vunpack.c.l.b16 %v96
    %v137 = vpack.c.b16 %v122, %v121
    %v138 = vpack.c.b16 %v124, %v123
    %v139 = vpack.c.b16 %v126, %v125
    %v140 = vpack.c.b16 %v128, %v127
    %v141 = vpack.c.b16 %v130, %v129
    %v142 = vpack.c.b16 %v132, %v131
    %v143 = vpack.c.b16 %v134, %v133
    %v144 = vpack.c.b16 %v136, %v135
    %153 = vmatpush.bf16.xpose.msra.mxu0 %v144
    %154 = vmatpush.bf16.xpose.msra.mxu0 %v143
    %155 = vmatpush.bf16.xpose.msra.mxu0 %v142
    %156 = vmatpush.bf16.xpose.msra.mxu0 %v141
    %157 = vmatpush.bf16.xpose.msra.mxu0 %v140
    %158 = vmatpush.bf16.xpose.msra.mxu0 %v139
    %159 = vmatpush.bf16.xpose.msra.mxu0 %v138
    %160 = vmatpush.bf16.xpose.msra.mxu0 %v137
    %161 = vmatmul.bf16.gmra.mxu0 %v103
    %v162 = vpop.f32.mrf.mxu0
    %v163 = vadd.f32 %v98, %v162
    %v164 = vpop.f32.mrf.mxu0
    %v165 = vadd.f32 %v98, %v164
    %166 = vdwg.mxu0
    %v167 = vld [vmem:[#allocation8] sm:$0xf]
    %v168 = vld [vmem:[#allocation8 + $0x4] sm:$0xf]
    %v169 = vunpack.c.l.bf16 %v167
    %v170 = vunpack.c.l.bf16 %v168
    %v171 = vadd.f32 %v163, %v169
    %v172 = vadd.f32 %v165, %v170
    %173 = vadd.xlane.f32.xlu0 %v171
    %v174 = vpop.xlane.xlu0 %173
    %175 = vadd.xlane.f32.xlu0 %v172
    %v176 = vpop.xlane.xlu0 %175
    %v177 = vmul.f32 %v171, %v171
    %v178 = vmul.f32 %v172, %v172
    %179 = vadd.xlane.f32.xlu0 %v177
    %v180 = vpop.xlane.xlu0 %179
    %181 = vadd.xlane.f32.xlu0 %v178
    %v182 = vpop.xlane.xlu0 %181
    %v183 = vmul.f32 %v174, 0.0078125
    %v184 = vmul.f32 %v176, 0.0078125
    %v185 = vmul.f32 %v180, 0.0078125
    %v186 = vmul.f32 %v182, 0.0078125
    %v187 = vmul.f32 %v183, %v183
    %v188 = vmul.f32 %v184, %v184
    %v189 = vsub.f32 %v185, %v187
    %v190 = vsub.f32 %v186, %v188
    %v191 = vadd.f32 %v189, 1e-05
    %v192 = vadd.f32 %v190, 1e-05
    %v193 = vrsqrt.pop %v191
    %v194 = vmul.f32 %v193, %v191
    %v195 = vmul.f32 %v194, %v193
    %v196 = vmul.f32 0.5, %v195
    %v197 = vsub.f32 1.5, %v196
    %v198 = vmul.f32 %v193, %v197
    %vm199 = vweird.f32 %v191
    %vm200 = vweird.f32 %v193
    %vm201 = vmor %vm199, %vm200
    %v202 = vsel %vm201, %v193, %v198
    %v203 = vrsqrt.pop %v192
    %v204 = vmul.f32 %v203, %v192
    %v205 = vmul.f32 %v204, %v203
    %v206 = vmul.f32 0.5, %v205
    %v207 = vsub.f32 1.5, %v206
    %v208 = vmul.f32 %v203, %v207
    %vm209 = vweird.f32 %v192
    %vm210 = vweird.f32 %v203
    %vm211 = vmor %vm209, %vm210
    %v212 = vsel %vm211, %v203, %v208
    %v213 = vsub.f32 %v171, %v183
    %v214 = vsub.f32 %v172, %v184
    %v215 = vmul.f32 %v213, %v202
    %v216 = vmul.f32 %v214, %v212
    %v217 = vperm.slane %v97, 1
    %v218 = vmul.f32 %v215, %v217
    %v219 = vmul.f32 %v216, %v217
    %v220 = vperm.slane %v97, 2
    %v221 = vadd.f32 %v218, %v220
    %v222 = vadd.f32 %v219, %v220
    %223 = vst [vmem:[#allocation10] sm:$0xff] %v221
    %224 = vst [vmem:[#allocation10 + $0x8] sm:$0xff] %v222
    // Predicated region
    $region34: #{tpu_custom_call.1} parent=1 // pred_check
      _
    $region35: #{tpu_custom_call.1} parent=1 // pred_check_branch
      %226 = sbr.rel (0) target = $region37
    $region36: #{tpu_custom_call.1} parent=1 // pred_region
      %228 = vsyncadd [#allocation4], 0
      %s229 = sshll.u32 [#allocation10], 4
      %s230 = int_to_ptr.vmem [resolvable:$true] %s229
      %s231 = sshll.u32 %s4, 4
      %s232 = int_to_ptr.hbm [resolvable:$true] %s231
      %237 = dma.vmem_to_hbm [thread:$0]  %s230, 256, %s232, [#allocation4], 128, 128, 8
    $region37: #{tpu_custom_call.1} parent=1 // pred_fallthru
      _
    // Predicated region
    $region38: #{tpu_custom_call.1} parent=1 // pred_check
      _
    $region39: #{tpu_custom_call.1} parent=1 // pred_check_branch
      %239 = sbr.rel (0) target = $region41
    $region40: #{tpu_custom_call.1} parent=1 // pred_region
      %241 = dma.done [#allocation4], 256
    $region41: #{tpu_custom_call.1} parent=1 // pred_fallthru
      _
    %242 = vsyncpa [#allocation3], 1
    %243 = vsyncpa [#allocation6], 1
    %244 = vsyncpa [#allocation9], 1
    %245 = vsyncpa [#allocation4], 1

</llo_original>
